<compile_context>
chip_gen: v7x
topology: tpu7x:2x2x1
jax: 0.10.0
libtpu: 0.0.40
codegen_flags: <defaults>
</compile_context>

<pallas_src>
import numpy as np
import jax
import jax.numpy as jnp
from jax.experimental import pallas as pl
from jax.experimental.pallas import tpu as pltpu

# irreps_in = "2x0e + 2x1e + 1x2e"  ->  dim = 2*1 + 2*3 + 1*5 = 13, num_irreps = 5
IRREPS = [(2, 1), (2, 3), (1, 5)]          # (multiplicity, 2l+1)
DIM = sum(m * d for m, d in IRREPS)        # 13
NUM_IRREPS = sum(m for m, _ in IRREPS)     # 5
EPS = 1e-8
EPS_SQ = EPS * EPS

ITEMS_PER_ROW = 128                        # items packed along the lane axis
LROW = DIM * ITEMS_PER_ROW                 # 1664 lanes per packed row (mult. of 128)
H_MAX = max((d - 1) // 2 for _, d in IRREPS)   # 2 (largest irrep half-width)


def _round_up(x, m):
    return ((x + m - 1) // m) * m


def _build_component_tables():
    """Per-component constants within the period-DIM lane pattern:
       hw   : half-width of the irrep instance containing the component
       doff : lane offset from the component to its irrep's center component
       c2i  : irrep-instance index of the component
    """
    hw = np.zeros(DIM, np.int32)
    doff = np.zeros(DIM, np.int32)
    c2i = np.zeros(DIM, np.int32)
    row, idx = 0, 0
    for mul, d in IRREPS:
        h = (d - 1) // 2
        for _ in range(mul):
            center = row + h
            for j in range(d):
                hw[row + j] = h
                doff[row + j] = center - (row + j)
                c2i[row + j] = idx
            row += d
            idx += 1
    return hw, doff, c2i


_HW_C, _DOFF_C, _C2I = _build_component_tables()


def _lane_shift(a, k):
    """result[:, i] = a[:, i + k] (cyclic along lanes; wrapped lanes are never
    selected by the masks, since items never straddle a packed row)."""
    if k == 0:
        return a
    return jnp.concatenate([a[:, k:], a[:, :k]], axis=1)


def _make_kernel(tile_rows, chunk_rows):
    n_chunks = tile_rows // chunk_rows

    def kernel(x_ref, hw_ref, doff_ref, bias_ref, o_ref):
        # Per-lane constants (period DIM along 1664 lanes), hoisted out of the
        # chunk loop and broadcast once to the chunk's sublane extent.
        hw = hw_ref[...]                                    # (1, LROW) int32
        doff = doff_ref[...]                                # (1, LROW) int32
        bias = jnp.broadcast_to(bias_ref[...], (chunk_rows, LROW))
        w_masks = [jnp.broadcast_to(hw == h, (chunk_rows, LROW))
                   for h in range(1, H_MAX + 1)]
        p_masks = [jnp.broadcast_to(doff == h, (chunk_rows, LROW))
                   for h in range(1, H_MAX + 1)]
        m_masks = [jnp.broadcast_to(doff == -h, (chunk_rows, LROW))
                   for h in range(1, H_MAX + 1)]

        def chunk(ci, carry):
            r0 = pl.multiple_of(ci * chunk_rows, chunk_rows)
            x = x_ref[pl.ds(r0, chunk_rows), :].astype(jnp.float32)
            x2 = x * x
            # Centered lane-window sums: s (after step h) holds the width-(2h+1)
            # window sum, which is the exact squared norm at the center lane of
            # every width-(2h+1) irrep.  Non-center lanes hold unused (finite,
            # non-negative) values.
            n2 = x2
            s = x2
            for h in range(1, H_MAX + 1):
                s = s + _lane_shift(x2, h) + _lane_shift(x2, -h)
                n2 = jnp.where(w_masks[h - 1], s, n2)
            n2 = jnp.maximum(n2, EPS_SQ)
            inv_n = jax.lax.rsqrt(n2)              # 1 / norm
            norm = n2 * inv_n                      # sqrt(n2), reuses the rsqrt
            scal = jax.nn.sigmoid(norm + bias) * inv_n
            # Broadcast each irrep's center-lane scaling to every lane of its span.
            sc = scal
            for h in range(1, H_MAX + 1):
                sc = jnp.where(p_masks[h - 1], _lane_shift(scal, h), sc)
                sc = jnp.where(m_masks[h - 1], _lane_shift(scal, -h), sc)
            o_ref[pl.ds(r0, chunk_rows), :] = (sc * x).astype(o_ref.dtype)
            return carry

        jax.lax.fori_loop(0, n_chunks, chunk, 0)

    return kernel


def norm_activation(features, biases, *, tile_rows=512):
    """features: (..., DIM) float32; biases: (NUM_IRREPS,) float32."""
    orig_shape = features.shape
    xf = features.reshape(-1, DIM)
    B = xf.shape[0]

    # Pack 128 consecutive items per row: (B, 13) -> (B/128, 1664).  This is a
    # free, contiguous row-major reinterpretation (no transpose / HBM pass).
    B_pad = _round_up(B, ITEMS_PER_ROW)
    if B_pad != B:
        xf = jnp.pad(xf, ((0, B_pad - B), (0, 0)))   # pad only to 128 items
    R = B_pad // ITEMS_PER_ROW
    x2d = xf.reshape(R, LROW)

    # Row-tile selection: big tiles amortize the ~0.35us/step overhead, but keep
    # >= 4 grid steps (when R allows) so v7x's two TCs and the DMA pipeline get
    # work.  Tile rows stay a multiple of 8 (or equal the full row count).
    if R <= 8:
        tr = R
    else:
        tr = max(8, (min(tile_rows, R) // 8) * 8)
        while tr > 8 and pl.cdiv(R, tr) < 4:
            tr = max(8, ((tr // 2) // 8) * 8)
    rc = min(8, tr)                       # inner chunk bounds in-kernel temps
    grid = pl.cdiv(R, tr)                 # last block may be partial (masked)

    # Per-lane constant rows (tiny, resident across all grid steps).
    hw_row = jnp.asarray(np.tile(_HW_C, ITEMS_PER_ROW).reshape(1, LROW))
    doff_row = jnp.asarray(np.tile(_DOFF_C, ITEMS_PER_ROW).reshape(1, LROW))
    bias_row = jnp.tile(biases.astype(jnp.float32)[_C2I],
                        ITEMS_PER_ROW).reshape(1, LROW)

    out2d = pl.pallas_call(
        _make_kernel(tr, rc),
        out_shape=jax.ShapeDtypeStruct((R, LROW), features.dtype),
        grid=(grid,),
        in_specs=[
            pl.BlockSpec((tr, LROW), lambda i: (i, 0)),     # x row-tile
            pl.BlockSpec((1, LROW), lambda i: (0, 0)),      # half-widths (resident)
            pl.BlockSpec((1, LROW), lambda i: (0, 0)),      # center offsets (resident)
            pl.BlockSpec((1, LROW), lambda i: (0, 0)),      # per-lane bias (resident)
        ],
        out_specs=pl.BlockSpec((tr, LROW), lambda i: (i, 0)),
        compiler_params=pltpu.CompilerParams(
            dimension_semantics=("parallel",),
            vmem_limit_bytes=48 * 1024 * 1024,
        ),
    )(x2d, hw_row, doff_row, bias_row)

    out = out2d.reshape(B_pad, DIM)[:B]
    return out.reshape(orig_shape)


def norm_activation_reference(features, biases):
    """Pure-JAX reference mirroring the PyTorch forward exactly."""
    xf = features.reshape(-1, DIM)
    outs = []
    off = 0
    idx = 0
    for mul, d in IRREPS:
        for _ in range(mul):
            xi = xf[:, off:off + d]
            n2 = jnp.sum(xi * xi, axis=-1, keepdims=True)
            n2 = jnp.maximum(n2, EPS_SQ)
            n = jnp.sqrt(n2)
            s = jax.nn.sigmoid(n + biases[idx]) / n
            outs.append(s * xi)
            off += d
            idx += 1
    return jnp.concatenate(outs, axis=-1).reshape(features.shape)


if __name__ == "__main__":
    key = jax.random.PRNGKey(0)
    kx, kb = jax.random.split(key)
    # input of shape (..., irreps_in.dim) -> (2, 8, 13); flattened batch = 16
    x = jax.random.normal(kx, (2, 8, DIM), dtype=jnp.float32)
    # module __init__ sets biases = zeros(num_irreps); use small deterministic
    # nonzero values so the bias path is actually exercised.
    biases = 0.1 * jax.random.normal(kb, (NUM_IRREPS,), dtype=jnp.float32)

    out = norm_activation(x, biases)
    out = jax.block_until_ready(out)

    ref = norm_activation_reference(x, biases)
    np.testing.assert_allclose(np.asarray(out), np.asarray(ref), rtol=1e-5, atol=1e-5)
    print("KERNEL_OK")
</pallas_src>

<mosaic_0001>
module attributes {stable_mosaic.version = 11 : i64} {
  func.func @kernel(%arg0: i32, %arg1: memref<1x1664xf32, #tpu.memory_space<vmem>>, %arg2: memref<1x1664xi32, #tpu.memory_space<vmem>>, %arg3: memref<1x1664xi32, #tpu.memory_space<vmem>>, %arg4: memref<1x1664xf32, #tpu.memory_space<vmem>>, %arg5: memref<1x1664xf32, #tpu.memory_space<vmem>>) attributes {dimension_semantics = [#tpu.dimension_semantics<parallel>], iteration_bounds = array<i64: 1>, scalar_prefetch = 0 : i64, scratch_operands = 0 : i64, tpu.core_type = #tpu.core_type<tc>, window_params = [{transform_indices = @transform_0, window_bounds = array<i64: 1, 1664>}, {pipeline_mode = #tpu.pipeline_mode<synchronous>, transform_indices = @transform_1, window_bounds = array<i64: 1, 1664>}, {pipeline_mode = #tpu.pipeline_mode<synchronous>, transform_indices = @transform_2, window_bounds = array<i64: 1, 1664>}, {pipeline_mode = #tpu.pipeline_mode<synchronous>, transform_indices = @transform_3, window_bounds = array<i64: 1, 1664>}, {transform_indices = @transform_4, window_bounds = array<i64: 1, 1664>}]} {
    %c0 = arith.constant 0 : index
    %c0_0 = arith.constant 0 : index
    %0 = vector.load %arg2[%c0, %c0_0] : memref<1x1664xi32, #tpu.memory_space<vmem>>, vector<1x1664xi32>
    %c0_1 = arith.constant 0 : index
    %c0_2 = arith.constant 0 : index
    %1 = vector.load %arg3[%c0_1, %c0_2] : memref<1x1664xi32, #tpu.memory_space<vmem>>, vector<1x1664xi32>
    %c0_3 = arith.constant 0 : index
    %c0_4 = arith.constant 0 : index
    %2 = vector.load %arg4[%c0_3, %c0_4] : memref<1x1664xf32, #tpu.memory_space<vmem>>, vector<1x1664xf32>
    %c1_i32 = arith.constant 1 : i32
    %3 = vector.broadcast %c1_i32 : i32 to vector<1x1664xi32>
    %4 = arith.cmpi eq, %0, %3 : vector<1x1664xi32>
    %c2_i32 = arith.constant 2 : i32
    %5 = vector.broadcast %c2_i32 : i32 to vector<1x1664xi32>
    %6 = arith.cmpi eq, %0, %5 : vector<1x1664xi32>
    %c1_i32_5 = arith.constant 1 : i32
    %7 = vector.broadcast %c1_i32_5 : i32 to vector<1x1664xi32>
    %8 = arith.cmpi eq, %1, %7 : vector<1x1664xi32>
    %c2_i32_6 = arith.constant 2 : i32
    %9 = vector.broadcast %c2_i32_6 : i32 to vector<1x1664xi32>
    %10 = arith.cmpi eq, %1, %9 : vector<1x1664xi32>
    %c-1_i32 = arith.constant -1 : i32
    %11 = vector.broadcast %c-1_i32 : i32 to vector<1x1664xi32>
    %12 = arith.cmpi eq, %1, %11 : vector<1x1664xi32>
    %c-2_i32 = arith.constant -2 : i32
    %13 = vector.broadcast %c-2_i32 : i32 to vector<1x1664xi32>
    %14 = arith.cmpi eq, %1, %13 : vector<1x1664xi32>
    %c0_i32 = arith.constant 0 : i32
    %c1_i32_7 = arith.constant 1 : i32
    %15 = arith.muli %c0_i32, %c1_i32_7 : i32
    %16 = tpu.assume_multiple %15, 1 : i32
    %17 = arith.index_cast %16 : i32 to index
    %c0_8 = arith.constant 0 : index
    %18 = vector.load %arg1[%17, %c0_8] : memref<1x1664xf32, #tpu.memory_space<vmem>>, vector<1x1664xf32>
    %19 = arith.mulf %18, %18 : vector<1x1664xf32>
    %20 = vector.extract_strided_slice %19 {offsets = [0, 1], sizes = [1, 1663], strides = [1, 1]} : vector<1x1664xf32> to vector<1x1663xf32>
    %21 = vector.extract_strided_slice %19 {offsets = [0, 0], sizes = [1, 1], strides = [1, 1]} : vector<1x1664xf32> to vector<1x1xf32>
    %22 = tpu.concatenate %20, %21 in 1 : vector<1x1663xf32>, vector<1x1xf32> -> vector<1x1664xf32>
    %23 = arith.addf %19, %22 : vector<1x1664xf32>
    %24 = vector.extract_strided_slice %19 {offsets = [0, 1663], sizes = [1, 1], strides = [1, 1]} : vector<1x1664xf32> to vector<1x1xf32>
    %25 = vector.extract_strided_slice %19 {offsets = [0, 0], sizes = [1, 1663], strides = [1, 1]} : vector<1x1664xf32> to vector<1x1663xf32>
    %26 = tpu.concatenate %24, %25 in 1 : vector<1x1xf32>, vector<1x1663xf32> -> vector<1x1664xf32>
    %27 = arith.addf %23, %26 : vector<1x1664xf32>
    %28 = arith.select %4, %27, %19 : vector<1x1664xi1>, vector<1x1664xf32>
    %29 = vector.extract_strided_slice %19 {offsets = [0, 2], sizes = [1, 1662], strides = [1, 1]} : vector<1x1664xf32> to vector<1x1662xf32>
    %30 = vector.extract_strided_slice %19 {offsets = [0, 0], sizes = [1, 2], strides = [1, 1]} : vector<1x1664xf32> to vector<1x2xf32>
    %31 = tpu.concatenate %29, %30 in 1 : vector<1x1662xf32>, vector<1x2xf32> -> vector<1x1664xf32>
    %32 = arith.addf %27, %31 : vector<1x1664xf32>
    %33 = vector.extract_strided_slice %19 {offsets = [0, 1662], sizes = [1, 2], strides = [1, 1]} : vector<1x1664xf32> to vector<1x2xf32>
    %34 = vector.extract_strided_slice %19 {offsets = [0, 0], sizes = [1, 1662], strides = [1, 1]} : vector<1x1664xf32> to vector<1x1662xf32>
    %35 = tpu.concatenate %33, %34 in 1 : vector<1x2xf32>, vector<1x1662xf32> -> vector<1x1664xf32>
    %36 = arith.addf %32, %35 : vector<1x1664xf32>
    %37 = arith.select %6, %36, %28 : vector<1x1664xi1>, vector<1x1664xf32>
    %cst = arith.constant 1.000000e-16 : f32
    %38 = vector.broadcast %cst : f32 to vector<1x1664xf32>
    %39 = arith.maximumf %37, %38 : vector<1x1664xf32>
    %40 = math.rsqrt %39 : vector<1x1664xf32>
    %41 = arith.mulf %39, %40 : vector<1x1664xf32>
    %42 = arith.addf %41, %2 : vector<1x1664xf32>
    %43 = arith.negf %42 : vector<1x1664xf32>
    %44 = math.exp %43 : vector<1x1664xf32>
    %cst_9 = arith.constant 1.000000e+00 : f32
    %45 = vector.broadcast %cst_9 : f32 to vector<1x1664xf32>
    %46 = arith.addf %45, %44 : vector<1x1664xf32>
    %47 = arith.divf %45, %46 : vector<1x1664xf32>
    %48 = arith.mulf %47, %40 : vector<1x1664xf32>
    %49 = vector.extract_strided_slice %48 {offsets = [0, 1], sizes = [1, 1663], strides = [1, 1]} : vector<1x1664xf32> to vector<1x1663xf32>
    %50 = vector.extract_strided_slice %48 {offsets = [0, 0], sizes = [1, 1], strides = [1, 1]} : vector<1x1664xf32> to vector<1x1xf32>
    %51 = tpu.concatenate %49, %50 in 1 : vector<1x1663xf32>, vector<1x1xf32> -> vector<1x1664xf32>
    %52 = arith.select %8, %51, %48 : vector<1x1664xi1>, vector<1x1664xf32>
    %53 = vector.extract_strided_slice %48 {offsets = [0, 1663], sizes = [1, 1], strides = [1, 1]} : vector<1x1664xf32> to vector<1x1xf32>
    %54 = vector.extract_strided_slice %48 {offsets = [0, 0], sizes = [1, 1663], strides = [1, 1]} : vector<1x1664xf32> to vector<1x1663xf32>
    %55 = tpu.concatenate %53, %54 in 1 : vector<1x1xf32>, vector<1x1663xf32> -> vector<1x1664xf32>
    %56 = arith.select %12, %55, %52 : vector<1x1664xi1>, vector<1x1664xf32>
    %57 = vector.extract_strided_slice %48 {offsets = [0, 2], sizes = [1, 1662], strides = [1, 1]} : vector<1x1664xf32> to vector<1x1662xf32>
    %58 = vector.extract_strided_slice %48 {offsets = [0, 0], sizes = [1, 2], strides = [1, 1]} : vector<1x1664xf32> to vector<1x2xf32>
    %59 = tpu.concatenate %57, %58 in 1 : vector<1x1662xf32>, vector<1x2xf32> -> vector<1x1664xf32>
    %60 = arith.select %10, %59, %56 : vector<1x1664xi1>, vector<1x1664xf32>
    %61 = vector.extract_strided_slice %48 {offsets = [0, 1662], sizes = [1, 2], strides = [1, 1]} : vector<1x1664xf32> to vector<1x2xf32>
    %62 = vector.extract_strided_slice %48 {offsets = [0, 0], sizes = [1, 1662], strides = [1, 1]} : vector<1x1664xf32> to vector<1x1662xf32>
    %63 = tpu.concatenate %61, %62 in 1 : vector<1x2xf32>, vector<1x1662xf32> -> vector<1x1664xf32>
    %64 = arith.select %14, %63, %60 : vector<1x1664xi1>, vector<1x1664xf32>
    %65 = arith.mulf %64, %18 : vector<1x1664xf32>
    %66 = arith.index_cast %16 : i32 to index
    %c0_10 = arith.constant 0 : index
    %67 = vector.load %arg5[%66, %c0_10] : memref<1x1664xf32, #tpu.memory_space<vmem>>, vector<1x1664xf32>
    tpu.vector_store %arg5[%66, %c0_10], %65 {strides = array<i32>} : memref<1x1664xf32, #tpu.memory_space<vmem>>, vector<1x1664xf32>,
    %c1_i32_11 = arith.constant 1 : i32
    return
  }
  func.func @transform_0(%arg0: i32) -> (i32, i32) {
    %c0_i32 = arith.constant 0 : i32
    %c0_i32_0 = arith.constant 0 : i32
    return %arg0, %c0_i32 : i32, i32
  }
  func.func @transform_1(%arg0: i32) -> (i32, i32) {
    %c0_i32 = arith.constant 0 : i32
    %c0_i32_0 = arith.constant 0 : i32
    %c0_i32_1 = arith.constant 0 : i32
    return %c0_i32, %c0_i32_0 : i32, i32
  }
  func.func @transform_2(%arg0: i32) -> (i32, i32) {
    %c0_i32 = arith.constant 0 : i32
    %c0_i32_0 = arith.constant 0 : i32
    %c0_i32_1 = arith.constant 0 : i32
    return %c0_i32, %c0_i32_0 : i32, i32
  }
  func.func @transform_3(%arg0: i32) -> (i32, i32) {
    %c0_i32 = arith.constant 0 : i32
    %c0_i32_0 = arith.constant 0 : i32
    %c0_i32_1 = arith.constant 0 : i32
    return %c0_i32, %c0_i32_0 : i32, i32
  }
  func.func @transform_4(%arg0: i32) -> (i32, i32) {
    %c0_i32 = arith.constant 0 : i32
    %c0_i32_0 = arith.constant 0 : i32
    return %arg0, %c0_i32 : i32, i32
  }
}

</mosaic_0001>

<llo_original>
// kernel: tpu_custom_call.1
$region0: #{tpu_custom_call.1}
  #allocation0 [shape = 'u32[]', space=smem, size = 0x4, offset = 0x4, fixed_abs, tag = 'smem constant byte address 0x4 - core index']
  #allocation1 [shape = 'u32[144,128]{1,0:T(1,128)}', space=vmem, size = 0x12000, scoped, tag = 'internal scratch']
  %s0 = inlined_call_operand.hbm [shape: f32[1,1664], index: 0, kind: input, shape index: {}]
  %s1 = inlined_call_operand.hbm [shape: s32[1,1664], index: 1, kind: input, shape index: {}]
  %s2 = inlined_call_operand.hbm [shape: s32[1,1664], index: 2, kind: input, shape index: {}]
  %s3 = inlined_call_operand.hbm [shape: f32[1,1664], index: 3, kind: input, shape index: {}]
  %s4 = inlined_call_operand.hbm [shape: f32[1,1664], index: 4, kind: output, shape index: {}]
  %s5 = sld [smem:[#allocation0]]
  $region42: #{tpu_custom_call.1} parent=0
    _
  %s7 = ssub.s32 1, %s5
  %s8 = scalar_select 0, %s7, %s5
  $region1: #{tpu_custom_call.1} parent=0
    #allocation2 [shape = 'u8[6656]{0}', space=vmem, size = 0x1c00, scoped, tag = 'input window, operand 0, single buffered']
    #allocation3 [shape = 's32[1]{0}', space=sflag, size = 0x4, scoped, tag = 'scoped memory for tpu_custom_call.1']
    #allocation4 [shape = 's32[1]{0}', space=sflag, size = 0x4, scoped, tag = 'scoped memory for tpu_custom_call.1']
    #allocation5 [shape = 'u8[6656]{0}', space=vmem, size = 0x1c00, scoped, tag = 'input window, operand 1, single buffered']
    #allocation6 [shape = 's32[1]{0}', space=sflag, size = 0x4, scoped, tag = 'scoped memory for tpu_custom_call.1']
    #allocation7 [shape = 'u8[6656]{0}', space=vmem, size = 0x1c00, scoped, tag = 'input window, operand 2, single buffered']
    #allocation8 [shape = 'u8[6656]{0}', space=vmem, size = 0x1c00, scoped, tag = 'input window, operand 3, single buffered']
    #allocation9 [shape = 's32[1]{0}', space=sflag, size = 0x4, scoped, tag = 'scoped memory for tpu_custom_call.1']
    #allocation10 [shape = 'u8[6656]{0}', space=vmem, size = 0x1c00, scoped, tag = 'output window, operand 0, single buffered']
    %9 = vsyncpa [#allocation3], 0
    %10 = vsyncpa [#allocation6], 0
    %11 = vsyncpa [#allocation9], 0
    %12 = vsyncpa [#allocation4], 0
    // Predicated region
    $region2: #{tpu_custom_call.1} parent=1 // pred_check
      _
    $region3: #{tpu_custom_call.1} parent=1 // pred_check_branch
      %14 = sbr.rel (0) target = $region5
    $region4: #{tpu_custom_call.1} parent=1 // pred_region
      %s16 = ssub.s32 208, 208
      %17 = vsyncadd [#allocation3], %s16
      %s19 = sshll.u32 [#allocation2], 4
      %s20 = int_to_ptr.vmem [resolvable:$true] %s19
      %22 = dma.hbm_to_vmem [thread:$0]  %s0, 208, %s20, [#allocation3]
    $region5: #{tpu_custom_call.1} parent=1 // pred_fallthru
      _
    // Predicated region
    $region6: #{tpu_custom_call.1} parent=1 // pred_check
      _
    $region7: #{tpu_custom_call.1} parent=1 // pred_check_branch
      %24 = sbr.rel (0) target = $region9
    $region8: #{tpu_custom_call.1} parent=1 // pred_region
      %s26 = ssub.s32 208, 208
      %27 = vsyncadd [#allocation6], %s26
      %s29 = sshll.u32 [#allocation5], 4
      %s30 = int_to_ptr.vmem [resolvable:$true] %s29
      %32 = dma.hbm_to_vmem [thread:$0]  %s1, 208, %s30, [#allocation6]
    $region9: #{tpu_custom_call.1} parent=1 // pred_fallthru
      _
    // Predicated region
    $region10: #{tpu_custom_call.1} parent=1 // pred_check
      _
    $region11: #{tpu_custom_call.1} parent=1 // pred_check_branch
      %34 = sbr.rel (0) target = $region13
    $region12: #{tpu_custom_call.1} parent=1 // pred_region
      %s36 = ssub.s32 208, 208
      %37 = vsyncadd [#allocation6], %s36
      %s39 = sshll.u32 [#allocation7], 4
      %s40 = int_to_ptr.vmem [resolvable:$true] %s39
      %42 = dma.hbm_to_vmem [thread:$0]  %s2, 208, %s40, [#allocation6]
    $region13: #{tpu_custom_call.1} parent=1 // pred_fallthru
      _
    // Predicated region
    $region14: #{tpu_custom_call.1} parent=1 // pred_check
      _
    $region15: #{tpu_custom_call.1} parent=1 // pred_check_branch
      %44 = sbr.rel (0) target = $region17
    $region16: #{tpu_custom_call.1} parent=1 // pred_region
      %s46 = ssub.s32 208, 208
      %47 = vsyncadd [#allocation9], %s46
      %s49 = sshll.u32 [#allocation8], 4
      %s50 = int_to_ptr.vmem [resolvable:$true] %s49
      %52 = dma.hbm_to_vmem [thread:$0]  %s3, 208, %s50, [#allocation9]
    $region17: #{tpu_custom_call.1} parent=1 // pred_fallthru
      _
    // Predicated region
    $region18: #{tpu_custom_call.1} parent=1 // pred_check
      _
    $region19: #{tpu_custom_call.1} parent=1 // pred_check_branch
      %54 = sbr.rel (0) target = $region21
    $region20: #{tpu_custom_call.1} parent=1 // pred_region
      %55 = dma.done [#allocation3], 208
    $region21: #{tpu_custom_call.1} parent=1 // pred_fallthru
      _
    // Predicated region
    $region22: #{tpu_custom_call.1} parent=1 // pred_check
      _
    $region23: #{tpu_custom_call.1} parent=1 // pred_check_branch
      %57 = sbr.rel (0) target = $region25
    $region24: #{tpu_custom_call.1} parent=1 // pred_region
      %58 = dma.done [#allocation6], 208
    $region25: #{tpu_custom_call.1} parent=1 // pred_fallthru
      _
    // Predicated region
    $region26: #{tpu_custom_call.1} parent=1 // pred_check
      _
    $region27: #{tpu_custom_call.1} parent=1 // pred_check_branch
      %60 = sbr.rel (0) target = $region29
    $region28: #{tpu_custom_call.1} parent=1 // pred_region
      %61 = dma.done [#allocation6], 208
    $region29: #{tpu_custom_call.1} parent=1 // pred_fallthru
      _
    // Predicated region
    $region30: #{tpu_custom_call.1} parent=1 // pred_check
      _
    $region31: #{tpu_custom_call.1} parent=1 // pred_check_branch
      %63 = sbr.rel (0) target = $region33
    $region32: #{tpu_custom_call.1} parent=1 // pred_region
      %64 = dma.done [#allocation9], 208
    $region33: #{tpu_custom_call.1} parent=1 // pred_fallthru
      _
    %v65 = vld [vmem:[#allocation5] sm:$0xff]
    %v66 = vld [vmem:[#allocation5 + $0x8] sm:$0x1f]
    %v67 = vld [vmem:[#allocation7] sm:$0xff]
    %v68 = vld [vmem:[#allocation7 + $0x8] sm:$0x1f]
    %v69 = vld [vmem:[#allocation8] sm:$0xff]
    %v70 = vld [vmem:[#allocation8 + $0x8] sm:$0x1f]
    %vm71 = vcmp.eq.s32.totalorder %v65, 1
    %vm72 = vcmp.eq.s32.totalorder %v66, 1
    %vm73 = vcmp.eq.s32.totalorder %v65, 2
    %vm74 = vcmp.eq.s32.totalorder %v66, 2
    %vm75 = vcmp.eq.s32.totalorder %v67, 1
    %vm76 = vcmp.eq.s32.totalorder %v68, 1
    %vm77 = vcmp.eq.s32.totalorder %v67, 2
    %vm78 = vcmp.eq.s32.totalorder %v68, 2
    %vm79 = vcmp.eq.s32.totalorder %v67, 4294967295
    %vm80 = vcmp.eq.s32.totalorder %v68, 4294967295
    %vm81 = vcmp.eq.s32.totalorder %v67, 4294967294
    %vm82 = vcmp.eq.s32.totalorder %v68, 4294967294
    %s83 = smul.u32 0, 13
    %s84 = scalar_lea.vmem [#allocation2], %s83
    %v85 = vld [vmem:[%s84] sm:$0xff]
    %v86 = vld [vmem:[%s84 + $0x8] sm:$0x1f]
    %v87 = vmul.f32 %v85, %v85
    %v88 = vmul.f32 %v86, %v86
    %v91 = vlaneseq
    %v92 = vshrl.u32 %v91, 7
    %v93 = vsub.s32 0, %v92
    %v94 = vrot.slane %v87, %v93
    %v95 = vlaneseq
    %v96 = vshrl.u32 %v95, 7
    %v97 = vsub.s32 1, %v96
    %v98 = vrot.slane %v87, %v97
    %v99 = vlaneseq
    %v100 = vshrl.u32 %v99, 7
    %v101 = vsub.s32 2, %v100
    %v102 = vrot.slane %v87, %v101
    %v103 = vlaneseq
    %v104 = vshrl.u32 %v103, 7
    %v105 = vsub.s32 3, %v104
    %v106 = vrot.slane %v87, %v105
    %v107 = vlaneseq
    %v108 = vshrl.u32 %v107, 7
    %v109 = vsub.s32 4, %v108
    %v110 = vrot.slane %v87, %v109
    %v111 = vlaneseq
    %v112 = vshrl.u32 %v111, 7
    %v113 = vsub.s32 5, %v112
    %v114 = vrot.slane %v87, %v113
    %v115 = vlaneseq
    %v116 = vshrl.u32 %v115, 7
    %v117 = vsub.s32 6, %v116
    %v118 = vrot.slane %v87, %v117
    %v119 = vlaneseq
    %v120 = vshrl.u32 %v119, 7
    %v121 = vsub.s32 7, %v120
    %v122 = vrot.slane %v87, %v121
    %v123 = vlaneseq
    %v124 = vshrl.u32 %v123, 7
    %v125 = vsub.s32 0, %v124
    %v126 = vrot.slane %v88, %v125
    %v127 = vlaneseq
    %v128 = vshrl.u32 %v127, 7
    %v129 = vsub.s32 1, %v128
    %v130 = vrot.slane %v88, %v129
    %v131 = vlaneseq
    %v132 = vshrl.u32 %v131, 7
    %v133 = vsub.s32 2, %v132
    %v134 = vrot.slane %v88, %v133
    %v135 = vlaneseq
    %v136 = vshrl.u32 %v135, 7
    %v137 = vsub.s32 3, %v136
    %v138 = vrot.slane %v88, %v137
    %v139 = vlaneseq
    %v140 = vshrl.u32 %v139, 7
    %v141 = vsub.s32 4, %v140
    %v142 = vrot.slane %v88, %v141
    %143 = vrot.lane.b32.xlu0 %v94, 127
    %v144 = vpop.permute.xlu0 %143
    %145 = vrot.lane.b32.xlu0 %v98, 127
    %v146 = vpop.permute.xlu0 %145
    %147 = vrot.lane.b32.xlu0 %v102, 127
    %v148 = vpop.permute.xlu0 %147
    %149 = vrot.lane.b32.xlu0 %v106, 127
    %v150 = vpop.permute.xlu0 %149
    %151 = vrot.lane.b32.xlu0 %v110, 127
    %v152 = vpop.permute.xlu0 %151
    %153 = vrot.lane.b32.xlu0 %v114, 127
    %v154 = vpop.permute.xlu0 %153
    %155 = vrot.lane.b32.xlu0 %v118, 127
    %v156 = vpop.permute.xlu0 %155
    %157 = vrot.lane.b32.xlu0 %v122, 127
    %v158 = vpop.permute.xlu0 %157
    %159 = vrot.lane.b32.xlu0 %v126, 127
    %v160 = vpop.permute.xlu0 %159
    %161 = vrot.lane.b32.xlu0 %v130, 127
    %v162 = vpop.permute.xlu0 %161
    %163 = vrot.lane.b32.xlu0 %v134, 127
    %v164 = vpop.permute.xlu0 %163
    %165 = vrot.lane.b32.xlu0 %v138, 127
    %v166 = vpop.permute.xlu0 %165
    %167 = vrot.lane.b32.xlu0 %v142, 127
    %v168 = vpop.permute.xlu0 %167
    %vm169 = vcmask 1039360
    %v170 = vsel %vm169, %v144, %v146
    %v171 = vsel %vm169, %v146, %v148
    %v172 = vsel %vm169, %v148, %v150
    %v173 = vsel %vm169, %v150, %v152
    %v174 = vsel %vm169, %v152, %v154
    %v175 = vsel %vm169, %v154, %v156
    %v176 = vsel %vm169, %v156, %v158
    %v177 = vsel %vm169, %v158, %v160
    %v178 = vsel %vm169, %v160, %v162
    %v179 = vsel %vm169, %v162, %v164
    %v180 = vsel %vm169, %v164, %v166
    %v181 = vsel %vm169, %v166, %v168
    %v184 = vsel %vm169, %v168, %v144
    %v186 = vcombine.low %v170, %v171
    %v187 = vcombine.low %v172, %v173
    %v188 = vcombine.low %v174, %v175
    %v189 = vcombine.low %v176, %v177
    %v191 = vunpack.c.l.s4 1966171168
    %v192 = vunpack.c.0.s8 %v191
    %v193 = vlaneseq
    %v194 = vshrl.u32 %v193, 7
    %v195 = vsub.s32 %v192, %v194
    %v196 = vrot.slane %v186, %v195
    %v198 = vunpack.c.l.s4 1966171168
    %v199 = vunpack.c.0.s8 %v198
    %v200 = vlaneseq
    %v201 = vshrl.u32 %v200, 7
    %v202 = vsub.s32 %v199, %v201
    %v203 = vrot.slane %v187, %v202
    %v205 = vunpack.c.l.s4 1966171168
    %v206 = vunpack.c.0.s8 %v205
    %v207 = vlaneseq
    %v208 = vshrl.u32 %v207, 7
    %v209 = vsub.s32 %v206, %v208
    %v210 = vrot.slane %v188, %v209
    %v212 = vunpack.c.l.s4 1966171168
    %v213 = vunpack.c.0.s8 %v212
    %v214 = vlaneseq
    %v215 = vshrl.u32 %v214, 7
    %v216 = vsub.s32 %v213, %v215
    %v217 = vrot.slane %v189, %v216
    %v218 = vcombine.low %v196, %v203
    %v219 = vcombine.low %v210, %v217
    %v221 = vunpack.c.l.s4 1966171168
    %v222 = vunpack.c.0.s8 %v221
    %v223 = vlaneseq
    %v224 = vshrl.u32 %v223, 7
    %v225 = vsub.s32 %v222, %v224
    %v226 = vrot.slane %v218, %v225
    %v228 = vunpack.c.l.s4 1966171168
    %v229 = vunpack.c.0.s8 %v228
    %v230 = vlaneseq
    %v231 = vshrl.u32 %v230, 7
    %v232 = vsub.s32 %v229, %v231
    %v233 = vrot.slane %v219, %v232
    %v234 = vcombine.low %v226, %v233
    %v235 = vcombine.low %v178, %v179
    %v236 = vcombine.low %v180, %v181
    %v238 = vunpack.c.l.s4 1966171168
    %v239 = vunpack.c.0.s8 %v238
    %v240 = vlaneseq
    %v241 = vshrl.u32 %v240, 7
    %v242 = vsub.s32 %v239, %v241
    %v243 = vrot.slane %v235, %v242
    %v245 = vunpack.c.l.s4 1966171168
    %v246 = vunpack.c.0.s8 %v245
    %v247 = vlaneseq
    %v248 = vshrl.u32 %v247, 7
    %v249 = vsub.s32 %v246, %v248
    %v250 = vrot.slane %v236, %v249
    %v252 = vunpack.c.l.s4 1966171168
    %v253 = vunpack.c.0.s8 %v252
    %v254 = vlaneseq
    %v255 = vshrl.u32 %v254, 7
    %v256 = vsub.s32 %v253, %v255
    %v257 = vrot.slane %v184, %v256
    %v258 = vcombine.low %v243, %v250
    %v260 = vunpack.c.l.s4 1966171168
    %v261 = vunpack.c.0.s8 %v260
    %v262 = vlaneseq
    %v263 = vshrl.u32 %v262, 7
    %v264 = vsub.s32 %v261, %v263
    %v265 = vrot.slane %v258, %v264
    %v267 = vunpack.c.l.s4 1966171168
    %v268 = vunpack.c.0.s8 %v267
    %v269 = vlaneseq
    %v270 = vshrl.u32 %v269, 7
    %v271 = vsub.s32 %v268, %v270
    %v272 = vrot.slane %v257, %v271
    %v273 = vcombine.low %v265, %v272
    %v276 = vadd.f32 %v87, %v234
    %v277 = vadd.f32 %v88, %v273
    %278 = vrot.lane.b32.xlu0 %v142, 1
    %v279 = vpop.permute.xlu0 %278
    %281 = vrot.lane.b32.xlu0 %v94, 1
    %v282 = vpop.permute.xlu0 %281
    %283 = vrot.lane.b32.xlu0 %v98, 1
    %v284 = vpop.permute.xlu0 %283
    %285 = vrot.lane.b32.xlu0 %v102, 1
    %v286 = vpop.permute.xlu0 %285
    %287 = vrot.lane.b32.xlu0 %v106, 1
    %v288 = vpop.permute.xlu0 %287
    %289 = vrot.lane.b32.xlu0 %v110, 1
    %v290 = vpop.permute.xlu0 %289
    %291 = vrot.lane.b32.xlu0 %v114, 1
    %v292 = vpop.permute.xlu0 %291
    %293 = vrot.lane.b32.xlu0 %v118, 1
    %v294 = vpop.permute.xlu0 %293
    %295 = vrot.lane.b32.xlu0 %v122, 1
    %v296 = vpop.permute.xlu0 %295
    %297 = vrot.lane.b32.xlu0 %v126, 1
    %v298 = vpop.permute.xlu0 %297
    %299 = vrot.lane.b32.xlu0 %v130, 1
    %v300 = vpop.permute.xlu0 %299
    %301 = vrot.lane.b32.xlu0 %v134, 1
    %v302 = vpop.permute.xlu0 %301
    %303 = vrot.lane.b32.xlu0 %v138, 1
    %v304 = vpop.permute.xlu0 %303
    %vm305 = vcmask 7168
    %v306 = vsel %vm305, %v282, %v284
    %v307 = vsel %vm305, %v284, %v286
    %v308 = vsel %vm305, %v286, %v288
    %v309 = vsel %vm305, %v288, %v290
    %v310 = vsel %vm305, %v290, %v292
    %v311 = vsel %vm305, %v292, %v294
    %v312 = vsel %vm305, %v294, %v296
    %v313 = vsel %vm305, %v296, %v298
    %v314 = vsel %vm305, %v298, %v300
    %v315 = vsel %vm305, %v300, %v302
    %v316 = vsel %vm305, %v302, %v304
    %v317 = vsel %vm305, %v304, %v279
    %v319 = vsel %vm305, %v279, %v282
    %v321 = vcombine.low %v319, %v306
    %v322 = vcombine.low %v307, %v308
    %v323 = vcombine.low %v309, %v310
    %v324 = vcombine.low %v311, %v312
    %v326 = vunpack.c.l.s4 1966171168
    %v327 = vunpack.c.0.s8 %v326
    %v328 = vlaneseq
    %v329 = vshrl.u32 %v328, 7
    %v330 = vsub.s32 %v327, %v329
    %v331 = vrot.slane %v321, %v330
    %v333 = vunpack.c.l.s4 1966171168
    %v334 = vunpack.c.0.s8 %v333
    %v335 = vlaneseq
    %v336 = vshrl.u32 %v335, 7
    %v337 = vsub.s32 %v334, %v336
    %v338 = vrot.slane %v322, %v337
    %v340 = vunpack.c.l.s4 1966171168
    %v341 = vunpack.c.0.s8 %v340
    %v342 = vlaneseq
    %v343 = vshrl.u32 %v342, 7
    %v344 = vsub.s32 %v341, %v343
    %v345 = vrot.slane %v323, %v344
    %v347 = vunpack.c.l.s4 1966171168
    %v348 = vunpack.c.0.s8 %v347
    %v349 = vlaneseq
    %v350 = vshrl.u32 %v349, 7
    %v351 = vsub.s32 %v348, %v350
    %v352 = vrot.slane %v324, %v351
    %v353 = vcombine.low %v331, %v338
    %v354 = vcombine.low %v345, %v352
    %v356 = vunpack.c.l.s4 1966171168
    %v357 = vunpack.c.0.s8 %v356
    %v358 = vlaneseq
    %v359 = vshrl.u32 %v358, 7
    %v360 = vsub.s32 %v357, %v359
    %v361 = vrot.slane %v353, %v360
    %v363 = vunpack.c.l.s4 1966171168
    %v364 = vunpack.c.0.s8 %v363
    %v365 = vlaneseq
    %v366 = vshrl.u32 %v365, 7
    %v367 = vsub.s32 %v364, %v366
    %v368 = vrot.slane %v354, %v367
    %v369 = vcombine.low %v361, %v368
    %v370 = vcombine.low %v313, %v314
    %v371 = vcombine.low %v315, %v316
    %v373 = vunpack.c.l.s4 1966171168
    %v374 = vunpack.c.0.s8 %v373
    %v375 = vlaneseq
    %v376 = vshrl.u32 %v375, 7
    %v377 = vsub.s32 %v374, %v376
    %v378 = vrot.slane %v370, %v377
    %v380 = vunpack.c.l.s4 1966171168
    %v381 = vunpack.c.0.s8 %v380
    %v382 = vlaneseq
    %v383 = vshrl.u32 %v382, 7
    %v384 = vsub.s32 %v381, %v383
    %v385 = vrot.slane %v371, %v384
    %v387 = vunpack.c.l.s4 1966171168
    %v388 = vunpack.c.0.s8 %v387
    %v389 = vlaneseq
    %v390 = vshrl.u32 %v389, 7
    %v391 = vsub.s32 %v388, %v390
    %v392 = vrot.slane %v317, %v391
    %v393 = vcombine.low %v378, %v385
    %v395 = vunpack.c.l.s4 1966171168
    %v396 = vunpack.c.0.s8 %v395
    %v397 = vlaneseq
    %v398 = vshrl.u32 %v397, 7
    %v399 = vsub.s32 %v396, %v398
    %v400 = vrot.slane %v393, %v399
    %v402 = vunpack.c.l.s4 1966171168
    %v403 = vunpack.c.0.s8 %v402
    %v404 = vlaneseq
    %v405 = vshrl.u32 %v404, 7
    %v406 = vsub.s32 %v403, %v405
    %v407 = vrot.slane %v392, %v406
    %v408 = vcombine.low %v400, %v407
    %v411 = vadd.f32 %v276, %v369
    %v412 = vadd.f32 %v277, %v408
    %v413 = vsel %vm71, %v411, %v87
    %v414 = vsel %vm72, %v412, %v88
    %415 = vrot.lane.b32.xlu0 %v94, 126
    %v416 = vpop.permute.xlu0 %415
    %417 = vrot.lane.b32.xlu0 %v98, 126
    %v418 = vpop.permute.xlu0 %417
    %419 = vrot.lane.b32.xlu0 %v102, 126
    %v420 = vpop.permute.xlu0 %419
    %421 = vrot.lane.b32.xlu0 %v106, 126
    %v422 = vpop.permute.xlu0 %421
    %423 = vrot.lane.b32.xlu0 %v110, 126
    %v424 = vpop.permute.xlu0 %423
    %425 = vrot.lane.b32.xlu0 %v114, 126
    %v426 = vpop.permute.xlu0 %425
    %427 = vrot.lane.b32.xlu0 %v118, 126
    %v428 = vpop.permute.xlu0 %427
    %429 = vrot.lane.b32.xlu0 %v122, 126
    %v430 = vpop.permute.xlu0 %429
    %431 = vrot.lane.b32.xlu0 %v126, 126
    %v432 = vpop.permute.xlu0 %431
    %433 = vrot.lane.b32.xlu0 %v130, 126
    %v434 = vpop.permute.xlu0 %433
    %435 = vrot.lane.b32.xlu0 %v134, 126
    %v436 = vpop.permute.xlu0 %435
    %437 = vrot.lane.b32.xlu0 %v138, 126
    %v438 = vpop.permute.xlu0 %437
    %439 = vrot.lane.b32.xlu0 %v142, 126
    %v440 = vpop.permute.xlu0 %439
    %vm441 = vcmask 1031168
    %v442 = vsel %vm441, %v416, %v418
    %v443 = vsel %vm441, %v418, %v420
    %v444 = vsel %vm441, %v420, %v422
    %v445 = vsel %vm441, %v422, %v424
    %v446 = vsel %vm441, %v424, %v426
    %v447 = vsel %vm441, %v426, %v428
    %v448 = vsel %vm441, %v428, %v430
    %v449 = vsel %vm441, %v430, %v432
    %v450 = vsel %vm441, %v432, %v434
    %v451 = vsel %vm441, %v434, %v436
    %v452 = vsel %vm441, %v436, %v438
    %v453 = vsel %vm441, %v438, %v440
    %v456 = vsel %vm441, %v440, %v416
    %v458 = vcombine.low %v442, %v443
    %v459 = vcombine.low %v444, %v445
    %v460 = vcombine.low %v446, %v447
    %v461 = vcombine.low %v448, %v449
    %v463 = vunpack.c.l.s4 1966171168
    %v464 = vunpack.c.0.s8 %v463
    %v465 = vlaneseq
    %v466 = vshrl.u32 %v465, 7
    %v467 = vsub.s32 %v464, %v466
    %v468 = vrot.slane %v458, %v467
    %v470 = vunpack.c.l.s4 1966171168
    %v471 = vunpack.c.0.s8 %v470
    %v472 = vlaneseq
    %v473 = vshrl.u32 %v472, 7
    %v474 = vsub.s32 %v471, %v473
    %v475 = vrot.slane %v459, %v474
    %v477 = vunpack.c.l.s4 1966171168
    %v478 = vunpack.c.0.s8 %v477
    %v479 = vlaneseq
    %v480 = vshrl.u32 %v479, 7
    %v481 = vsub.s32 %v478, %v480
    %v482 = vrot.slane %v460, %v481
    %v484 = vunpack.c.l.s4 1966171168
    %v485 = vunpack.c.0.s8 %v484
    %v486 = vlaneseq
    %v487 = vshrl.u32 %v486, 7
    %v488 = vsub.s32 %v485, %v487
    %v489 = vrot.slane %v461, %v488
    %v490 = vcombine.low %v468, %v475
    %v491 = vcombine.low %v482, %v489
    %v493 = vunpack.c.l.s4 1966171168
    %v494 = vunpack.c.0.s8 %v493
    %v495 = vlaneseq
    %v496 = vshrl.u32 %v495, 7
    %v497 = vsub.s32 %v494, %v496
    %v498 = vrot.slane %v490, %v497
    %v500 = vunpack.c.l.s4 1966171168
    %v501 = vunpack.c.0.s8 %v500
    %v502 = vlaneseq
    %v503 = vshrl.u32 %v502, 7
    %v504 = vsub.s32 %v501, %v503
    %v505 = vrot.slane %v491, %v504
    %v506 = vcombine.low %v498, %v505
    %v507 = vcombine.low %v450, %v451
    %v508 = vcombine.low %v452, %v453
    %v510 = vunpack.c.l.s4 1966171168
    %v511 = vunpack.c.0.s8 %v510
    %v512 = vlaneseq
    %v513 = vshrl.u32 %v512, 7
    %v514 = vsub.s32 %v511, %v513
    %v515 = vrot.slane %v507, %v514
    %v517 = vunpack.c.l.s4 1966171168
    %v518 = vunpack.c.0.s8 %v517
    %v519 = vlaneseq
    %v520 = vshrl.u32 %v519, 7
    %v521 = vsub.s32 %v518, %v520
    %v522 = vrot.slane %v508, %v521
    %v524 = vunpack.c.l.s4 1966171168
    %v525 = vunpack.c.0.s8 %v524
    %v526 = vlaneseq
    %v527 = vshrl.u32 %v526, 7
    %v528 = vsub.s32 %v525, %v527
    %v529 = vrot.slane %v456, %v528
    %v530 = vcombine.low %v515, %v522
    %v532 = vunpack.c.l.s4 1966171168
    %v533 = vunpack.c.0.s8 %v532
    %v534 = vlaneseq
    %v535 = vshrl.u32 %v534, 7
    %v536 = vsub.s32 %v533, %v535
    %v537 = vrot.slane %v530, %v536
    %v539 = vunpack.c.l.s4 1966171168
    %v540 = vunpack.c.0.s8 %v539
    %v541 = vlaneseq
    %v542 = vshrl.u32 %v541, 7
    %v543 = vsub.s32 %v540, %v542
    %v544 = vrot.slane %v529, %v543
    %v545 = vcombine.low %v537, %v544
    %v548 = vadd.f32 %v411, %v506
    %v549 = vadd.f32 %v412, %v545
    %550 = vrot.lane.b32.xlu0 %v142, 2
    %v551 = vpop.permute.xlu0 %550
    %553 = vrot.lane.b32.xlu0 %v94, 2
    %v554 = vpop.permute.xlu0 %553
    %555 = vrot.lane.b32.xlu0 %v98, 2
    %v556 = vpop.permute.xlu0 %555
    %557 = vrot.lane.b32.xlu0 %v102, 2
    %v558 = vpop.permute.xlu0 %557
    %559 = vrot.lane.b32.xlu0 %v106, 2
    %v560 = vpop.permute.xlu0 %559
    %561 = vrot.lane.b32.xlu0 %v110, 2
    %v562 = vpop.permute.xlu0 %561
    %563 = vrot.lane.b32.xlu0 %v114, 2
    %v564 = vpop.permute.xlu0 %563
    %565 = vrot.lane.b32.xlu0 %v118, 2
    %v566 = vpop.permute.xlu0 %565
    %567 = vrot.lane.b32.xlu0 %v122, 2
    %v568 = vpop.permute.xlu0 %567
    %569 = vrot.lane.b32.xlu0 %v126, 2
    %v570 = vpop.permute.xlu0 %569
    %571 = vrot.lane.b32.xlu0 %v130, 2
    %v572 = vpop.permute.xlu0 %571
    %573 = vrot.lane.b32.xlu0 %v134, 2
    %v574 = vpop.permute.xlu0 %573
    %575 = vrot.lane.b32.xlu0 %v138, 2
    %v576 = vpop.permute.xlu0 %575
    %vm577 = vcmask 15360
    %v578 = vsel %vm577, %v554, %v556
    %v579 = vsel %vm577, %v556, %v558
    %v580 = vsel %vm577, %v558, %v560
    %v581 = vsel %vm577, %v560, %v562
    %v582 = vsel %vm577, %v562, %v564
    %v583 = vsel %vm577, %v564, %v566
    %v584 = vsel %vm577, %v566, %v568
    %v585 = vsel %vm577, %v568, %v570
    %v586 = vsel %vm577, %v570, %v572
    %v587 = vsel %vm577, %v572, %v574
    %v588 = vsel %vm577, %v574, %v576
    %v589 = vsel %vm577, %v576, %v551
    %v591 = vsel %vm577, %v551, %v554
    %v593 = vcombine.low %v591, %v578
    %v594 = vcombine.low %v579, %v580
    %v595 = vcombine.low %v581, %v582
    %v596 = vcombine.low %v583, %v584
    %v598 = vunpack.c.l.s4 1966171168
    %v599 = vunpack.c.0.s8 %v598
    %v600 = vlaneseq
    %v601 = vshrl.u32 %v600, 7
    %v602 = vsub.s32 %v599, %v601
    %v603 = vrot.slane %v593, %v602
    %v605 = vunpack.c.l.s4 1966171168
    %v606 = vunpack.c.0.s8 %v605
    %v607 = vlaneseq
    %v608 = vshrl.u32 %v607, 7
    %v609 = vsub.s32 %v606, %v608
    %v610 = vrot.slane %v594, %v609
    %v612 = vunpack.c.l.s4 1966171168
    %v613 = vunpack.c.0.s8 %v612
    %v614 = vlaneseq
    %v615 = vshrl.u32 %v614, 7
    %v616 = vsub.s32 %v613, %v615
    %v617 = vrot.slane %v595, %v616
    %v619 = vunpack.c.l.s4 1966171168
    %v620 = vunpack.c.0.s8 %v619
    %v621 = vlaneseq
    %v622 = vshrl.u32 %v621, 7
    %v623 = vsub.s32 %v620, %v622
    %v624 = vrot.slane %v596, %v623
    %v625 = vcombine.low %v603, %v610
    %v626 = vcombine.low %v617, %v624
    %v628 = vunpack.c.l.s4 1966171168
    %v629 = vunpack.c.0.s8 %v628
    %v630 = vlaneseq
    %v631 = vshrl.u32 %v630, 7
    %v632 = vsub.s32 %v629, %v631
    %v633 = vrot.slane %v625, %v632
    %v635 = vunpack.c.l.s4 1966171168
    %v636 = vunpack.c.0.s8 %v635
    %v637 = vlaneseq
    %v638 = vshrl.u32 %v637, 7
    %v639 = vsub.s32 %v636, %v638
    %v640 = vrot.slane %v626, %v639
    %v641 = vcombine.low %v633, %v640
    %v642 = vcombine.low %v585, %v586
    %v643 = vcombine.low %v587, %v588
    %v645 = vunpack.c.l.s4 1966171168
    %v646 = vunpack.c.0.s8 %v645
    %v647 = vlaneseq
    %v648 = vshrl.u32 %v647, 7
    %v649 = vsub.s32 %v646, %v648
    %v650 = vrot.slane %v642, %v649
    %v652 = vunpack.c.l.s4 1966171168
    %v653 = vunpack.c.0.s8 %v652
    %v654 = vlaneseq
    %v655 = vshrl.u32 %v654, 7
    %v656 = vsub.s32 %v653, %v655
    %v657 = vrot.slane %v643, %v656
    %v659 = vunpack.c.l.s4 1966171168
    %v660 = vunpack.c.0.s8 %v659
    %v661 = vlaneseq
    %v662 = vshrl.u32 %v661, 7
    %v663 = vsub.s32 %v660, %v662
    %v664 = vrot.slane %v589, %v663
    %v665 = vcombine.low %v650, %v657
    %v667 = vunpack.c.l.s4 1966171168
    %v668 = vunpack.c.0.s8 %v667
    %v669 = vlaneseq
    %v670 = vshrl.u32 %v669, 7
    %v671 = vsub.s32 %v668, %v670
    %v672 = vrot.slane %v665, %v671
    %v674 = vunpack.c.l.s4 1966171168
    %v675 = vunpack.c.0.s8 %v674
    %v676 = vlaneseq
    %v677 = vshrl.u32 %v676, 7
    %v678 = vsub.s32 %v675, %v677
    %v679 = vrot.slane %v664, %v678
    %v680 = vcombine.low %v672, %v679
    %v683 = vadd.f32 %v548, %v641
    %v684 = vadd.f32 %v549, %v680
    %v685 = vsel %vm73, %v683, %v413
    %v686 = vsel %vm74, %v684, %v414
    %v687 = vmax.f32 %v685, 1e-16
    %v688 = vmax.f32 %v686, 1e-16
    %v689 = vrsqrt.pop %v687
    %v690 = vrsqrt.pop %v688
    %v691 = vmul.f32 %v687, %v689
    %v692 = vmul.f32 %v688, %v690
    %v693 = vadd.f32 %v691, %v69
    %v694 = vadd.f32 %v692, %v70
    %v695 = vxor.u32 %v693, 2147483648
    %v696 = vxor.u32 %v694, 2147483648
    %v697 = vmul.f32 %v695, 1.442695
    %v698 = vpow.pop %v697
    %v699 = vmul.f32 %v696, 1.442695
    %v700 = vpow.pop %v699
    %v701 = vadd.f32 %v698, 1.0
    %v702 = vadd.f32 %v700, 1.0
    %v703 = vrcp.pop %v701
    %v704 = vmul.f32 1.0, %v703
    %v705 = vrcp.pop %v702
    %v706 = vmul.f32 1.0, %v705
    %v707 = vmul.f32 %v704, %v689
    %v708 = vmul.f32 %v706, %v690
    %v711 = vlaneseq
    %v712 = vshrl.u32 %v711, 7
    %v713 = vsub.s32 0, %v712
    %v714 = vrot.slane %v707, %v713
    %v715 = vlaneseq
    %v716 = vshrl.u32 %v715, 7
    %v717 = vsub.s32 1, %v716
    %v718 = vrot.slane %v707, %v717
    %v719 = vlaneseq
    %v720 = vshrl.u32 %v719, 7
    %v721 = vsub.s32 2, %v720
    %v722 = vrot.slane %v707, %v721
    %v723 = vlaneseq
    %v724 = vshrl.u32 %v723, 7
    %v725 = vsub.s32 3, %v724
    %v726 = vrot.slane %v707, %v725
    %v727 = vlaneseq
    %v728 = vshrl.u32 %v727, 7
    %v729 = vsub.s32 4, %v728
    %v730 = vrot.slane %v707, %v729
    %v731 = vlaneseq
    %v732 = vshrl.u32 %v731, 7
    %v733 = vsub.s32 5, %v732
    %v734 = vrot.slane %v707, %v733
    %v735 = vlaneseq
    %v736 = vshrl.u32 %v735, 7
    %v737 = vsub.s32 6, %v736
    %v738 = vrot.slane %v707, %v737
    %v739 = vlaneseq
    %v740 = vshrl.u32 %v739, 7
    %v741 = vsub.s32 7, %v740
    %v742 = vrot.slane %v707, %v741
    %v743 = vlaneseq
    %v744 = vshrl.u32 %v743, 7
    %v745 = vsub.s32 0, %v744
    %v746 = vrot.slane %v708, %v745
    %v747 = vlaneseq
    %v748 = vshrl.u32 %v747, 7
    %v749 = vsub.s32 1, %v748
    %v750 = vrot.slane %v708, %v749
    %v751 = vlaneseq
    %v752 = vshrl.u32 %v751, 7
    %v753 = vsub.s32 2, %v752
    %v754 = vrot.slane %v708, %v753
    %v755 = vlaneseq
    %v756 = vshrl.u32 %v755, 7
    %v757 = vsub.s32 3, %v756
    %v758 = vrot.slane %v708, %v757
    %v759 = vlaneseq
    %v760 = vshrl.u32 %v759, 7
    %v761 = vsub.s32 4, %v760
    %v762 = vrot.slane %v708, %v761
    %763 = vrot.lane.b32.xlu0 %v714, 127
    %v764 = vpop.permute.xlu0 %763
    %765 = vrot.lane.b32.xlu0 %v718, 127
    %v766 = vpop.permute.xlu0 %765
    %767 = vrot.lane.b32.xlu0 %v722, 127
    %v768 = vpop.permute.xlu0 %767
    %769 = vrot.lane.b32.xlu0 %v726, 127
    %v770 = vpop.permute.xlu0 %769
    %771 = vrot.lane.b32.xlu0 %v730, 127
    %v772 = vpop.permute.xlu0 %771
    %773 = vrot.lane.b32.xlu0 %v734, 127
    %v774 = vpop.permute.xlu0 %773
    %775 = vrot.lane.b32.xlu0 %v738, 127
    %v776 = vpop.permute.xlu0 %775
    %777 = vrot.lane.b32.xlu0 %v742, 127
    %v778 = vpop.permute.xlu0 %777
    %779 = vrot.lane.b32.xlu0 %v746, 127
    %v780 = vpop.permute.xlu0 %779
    %781 = vrot.lane.b32.xlu0 %v750, 127
    %v782 = vpop.permute.xlu0 %781
    %783 = vrot.lane.b32.xlu0 %v754, 127
    %v784 = vpop.permute.xlu0 %783
    %785 = vrot.lane.b32.xlu0 %v758, 127
    %v786 = vpop.permute.xlu0 %785
    %787 = vrot.lane.b32.xlu0 %v762, 127
    %v788 = vpop.permute.xlu0 %787
    %v789 = vsel %vm169, %v764, %v766
    %v790 = vsel %vm169, %v766, %v768
    %v791 = vsel %vm169, %v768, %v770
    %v792 = vsel %vm169, %v770, %v772
    %v793 = vsel %vm169, %v772, %v774
    %v794 = vsel %vm169, %v774, %v776
    %v795 = vsel %vm169, %v776, %v778
    %v796 = vsel %vm169, %v778, %v780
    %v797 = vsel %vm169, %v780, %v782
    %v798 = vsel %vm169, %v782, %v784
    %v799 = vsel %vm169, %v784, %v786
    %v800 = vsel %vm169, %v786, %v788
    %v803 = vsel %vm169, %v788, %v764
    %v805 = vcombine.low %v789, %v790
    %v806 = vcombine.low %v791, %v792
    %v807 = vcombine.low %v793, %v794
    %v808 = vcombine.low %v795, %v796
    %v810 = vunpack.c.l.s4 1966171168
    %v811 = vunpack.c.0.s8 %v810
    %v812 = vlaneseq
    %v813 = vshrl.u32 %v812, 7
    %v814 = vsub.s32 %v811, %v813
    %v815 = vrot.slane %v805, %v814
    %v817 = vunpack.c.l.s4 1966171168
    %v818 = vunpack.c.0.s8 %v817
    %v819 = vlaneseq
    %v820 = vshrl.u32 %v819, 7
    %v821 = vsub.s32 %v818, %v820
    %v822 = vrot.slane %v806, %v821
    %v824 = vunpack.c.l.s4 1966171168
    %v825 = vunpack.c.0.s8 %v824
    %v826 = vlaneseq
    %v827 = vshrl.u32 %v826, 7
    %v828 = vsub.s32 %v825, %v827
    %v829 = vrot.slane %v807, %v828
    %v831 = vunpack.c.l.s4 1966171168
    %v832 = vunpack.c.0.s8 %v831
    %v833 = vlaneseq
    %v834 = vshrl.u32 %v833, 7
    %v835 = vsub.s32 %v832, %v834
    %v836 = vrot.slane %v808, %v835
    %v837 = vcombine.low %v815, %v822
    %v838 = vcombine.low %v829, %v836
    %v840 = vunpack.c.l.s4 1966171168
    %v841 = vunpack.c.0.s8 %v840
    %v842 = vlaneseq
    %v843 = vshrl.u32 %v842, 7
    %v844 = vsub.s32 %v841, %v843
    %v845 = vrot.slane %v837, %v844
    %v847 = vunpack.c.l.s4 1966171168
    %v848 = vunpack.c.0.s8 %v847
    %v849 = vlaneseq
    %v850 = vshrl.u32 %v849, 7
    %v851 = vsub.s32 %v848, %v850
    %v852 = vrot.slane %v838, %v851
    %v853 = vcombine.low %v845, %v852
    %v854 = vcombine.low %v797, %v798
    %v855 = vcombine.low %v799, %v800
    %v857 = vunpack.c.l.s4 1966171168
    %v858 = vunpack.c.0.s8 %v857
    %v859 = vlaneseq
    %v860 = vshrl.u32 %v859, 7
    %v861 = vsub.s32 %v858, %v860
    %v862 = vrot.slane %v854, %v861
    %v864 = vunpack.c.l.s4 1966171168
    %v865 = vunpack.c.0.s8 %v864
    %v866 = vlaneseq
    %v867 = vshrl.u32 %v866, 7
    %v868 = vsub.s32 %v865, %v867
    %v869 = vrot.slane %v855, %v868
    %v871 = vunpack.c.l.s4 1966171168
    %v872 = vunpack.c.0.s8 %v871
    %v873 = vlaneseq
    %v874 = vshrl.u32 %v873, 7
    %v875 = vsub.s32 %v872, %v874
    %v876 = vrot.slane %v803, %v875
    %v877 = vcombine.low %v862, %v869
    %v879 = vunpack.c.l.s4 1966171168
    %v880 = vunpack.c.0.s8 %v879
    %v881 = vlaneseq
    %v882 = vshrl.u32 %v881, 7
    %v883 = vsub.s32 %v880, %v882
    %v884 = vrot.slane %v877, %v883
    %v886 = vunpack.c.l.s4 1966171168
    %v887 = vunpack.c.0.s8 %v886
    %v888 = vlaneseq
    %v889 = vshrl.u32 %v888, 7
    %v890 = vsub.s32 %v887, %v889
    %v891 = vrot.slane %v876, %v890
    %v892 = vcombine.low %v884, %v891
    %v895 = vsel %vm75, %v853, %v707
    %v896 = vsel %vm76, %v892, %v708
    %897 = vrot.lane.b32.xlu0 %v762, 1
    %v898 = vpop.permute.xlu0 %897
    %900 = vrot.lane.b32.xlu0 %v714, 1
    %v901 = vpop.permute.xlu0 %900
    %902 = vrot.lane.b32.xlu0 %v718, 1
    %v903 = vpop.permute.xlu0 %902
    %904 = vrot.lane.b32.xlu0 %v722, 1
    %v905 = vpop.permute.xlu0 %904
    %906 = vrot.lane.b32.xlu0 %v726, 1
    %v907 = vpop.permute.xlu0 %906
    %908 = vrot.lane.b32.xlu0 %v730, 1
    %v909 = vpop.permute.xlu0 %908
    %910 = vrot.lane.b32.xlu0 %v734, 1
    %v911 = vpop.permute.xlu0 %910
    %912 = vrot.lane.b32.xlu0 %v738, 1
    %v913 = vpop.permute.xlu0 %912
    %914 = vrot.lane.b32.xlu0 %v742, 1
    %v915 = vpop.permute.xlu0 %914
    %916 = vrot.lane.b32.xlu0 %v746, 1
    %v917 = vpop.permute.xlu0 %916
    %918 = vrot.lane.b32.xlu0 %v750, 1
    %v919 = vpop.permute.xlu0 %918
    %920 = vrot.lane.b32.xlu0 %v754, 1
    %v921 = vpop.permute.xlu0 %920
    %922 = vrot.lane.b32.xlu0 %v758, 1
    %v923 = vpop.permute.xlu0 %922
    %v924 = vsel %vm305, %v901, %v903
    %v925 = vsel %vm305, %v903, %v905
    %v926 = vsel %vm305, %v905, %v907
    %v927 = vsel %vm305, %v907, %v909
    %v928 = vsel %vm305, %v909, %v911
    %v929 = vsel %vm305, %v911, %v913
    %v930 = vsel %vm305, %v913, %v915
    %v931 = vsel %vm305, %v915, %v917
    %v932 = vsel %vm305, %v917, %v919
    %v933 = vsel %vm305, %v919, %v921
    %v934 = vsel %vm305, %v921, %v923
    %v935 = vsel %vm305, %v923, %v898
    %v937 = vsel %vm305, %v898, %v901
    %v939 = vcombine.low %v937, %v924
    %v940 = vcombine.low %v925, %v926
    %v941 = vcombine.low %v927, %v928
    %v942 = vcombine.low %v929, %v930
    %v944 = vunpack.c.l.s4 1966171168
    %v945 = vunpack.c.0.s8 %v944
    %v946 = vlaneseq
    %v947 = vshrl.u32 %v946, 7
    %v948 = vsub.s32 %v945, %v947
    %v949 = vrot.slane %v939, %v948
    %v951 = vunpack.c.l.s4 1966171168
    %v952 = vunpack.c.0.s8 %v951
    %v953 = vlaneseq
    %v954 = vshrl.u32 %v953, 7
    %v955 = vsub.s32 %v952, %v954
    %v956 = vrot.slane %v940, %v955
    %v958 = vunpack.c.l.s4 1966171168
    %v959 = vunpack.c.0.s8 %v958
    %v960 = vlaneseq
    %v961 = vshrl.u32 %v960, 7
    %v962 = vsub.s32 %v959, %v961
    %v963 = vrot.slane %v941, %v962
    %v965 = vunpack.c.l.s4 1966171168
    %v966 = vunpack.c.0.s8 %v965
    %v967 = vlaneseq
    %v968 = vshrl.u32 %v967, 7
    %v969 = vsub.s32 %v966, %v968
    %v970 = vrot.slane %v942, %v969
    %v971 = vcombine.low %v949, %v956
    %v972 = vcombine.low %v963, %v970
    %v974 = vunpack.c.l.s4 1966171168
    %v975 = vunpack.c.0.s8 %v974
    %v976 = vlaneseq
    %v977 = vshrl.u32 %v976, 7
    %v978 = vsub.s32 %v975, %v977
    %v979 = vrot.slane %v971, %v978
    %v981 = vunpack.c.l.s4 1966171168
    %v982 = vunpack.c.0.s8 %v981
    %v983 = vlaneseq
    %v984 = vshrl.u32 %v983, 7
    %v985 = vsub.s32 %v982, %v984
    %v986 = vrot.slane %v972, %v985
    %v987 = vcombine.low %v979, %v986
    %v988 = vcombine.low %v931, %v932
    %v989 = vcombine.low %v933, %v934
    %v991 = vunpack.c.l.s4 1966171168
    %v992 = vunpack.c.0.s8 %v991
    %v993 = vlaneseq
    %v994 = vshrl.u32 %v993, 7
    %v995 = vsub.s32 %v992, %v994
    %v996 = vrot.slane %v988, %v995
    %v998 = vunpack.c.l.s4 1966171168
    %v999 = vunpack.c.0.s8 %v998
    %v1000 = vlaneseq
    %v1001 = vshrl.u32 %v1000, 7
    %v1002 = vsub.s32 %v999, %v1001
    %v1003 = vrot.slane %v989, %v1002
    %v1005 = vunpack.c.l.s4 1966171168
    %v1006 = vunpack.c.0.s8 %v1005
    %v1007 = vlaneseq
    %v1008 = vshrl.u32 %v1007, 7
    %v1009 = vsub.s32 %v1006, %v1008
    %v1010 = vrot.slane %v935, %v1009
    %v1011 = vcombine.low %v996, %v1003
    %v1013 = vunpack.c.l.s4 1966171168
    %v1014 = vunpack.c.0.s8 %v1013
    %v1015 = vlaneseq
    %v1016 = vshrl.u32 %v1015, 7
    %v1017 = vsub.s32 %v1014, %v1016
    %v1018 = vrot.slane %v1011, %v1017
    %v1020 = vunpack.c.l.s4 1966171168
    %v1021 = vunpack.c.0.s8 %v1020
    %v1022 = vlaneseq
    %v1023 = vshrl.u32 %v1022, 7
    %v1024 = vsub.s32 %v1021, %v1023
    %v1025 = vrot.slane %v1010, %v1024
    %v1026 = vcombine.low %v1018, %v1025
    %v1029 = vsel %vm79, %v987, %v895
    %v1030 = vsel %vm80, %v1026, %v896
    %1031 = vrot.lane.b32.xlu0 %v714, 126
    %v1032 = vpop.permute.xlu0 %1031
    %1033 = vrot.lane.b32.xlu0 %v718, 126
    %v1034 = vpop.permute.xlu0 %1033
    %1035 = vrot.lane.b32.xlu0 %v722, 126
    %v1036 = vpop.permute.xlu0 %1035
    %1037 = vrot.lane.b32.xlu0 %v726, 126
    %v1038 = vpop.permute.xlu0 %1037
    %1039 = vrot.lane.b32.xlu0 %v730, 126
    %v1040 = vpop.permute.xlu0 %1039
    %1041 = vrot.lane.b32.xlu0 %v734, 126
    %v1042 = vpop.permute.xlu0 %1041
    %1043 = vrot.lane.b32.xlu0 %v738, 126
    %v1044 = vpop.permute.xlu0 %1043
    %1045 = vrot.lane.b32.xlu0 %v742, 126
    %v1046 = vpop.permute.xlu0 %1045
    %1047 = vrot.lane.b32.xlu0 %v746, 126
    %v1048 = vpop.permute.xlu0 %1047
    %1049 = vrot.lane.b32.xlu0 %v750, 126
    %v1050 = vpop.permute.xlu0 %1049
    %1051 = vrot.lane.b32.xlu0 %v754, 126
    %v1052 = vpop.permute.xlu0 %1051
    %1053 = vrot.lane.b32.xlu0 %v758, 126
    %v1054 = vpop.permute.xlu0 %1053
    %1055 = vrot.lane.b32.xlu0 %v762, 126
    %v1056 = vpop.permute.xlu0 %1055
    %v1057 = vsel %vm441, %v1032, %v1034
    %v1058 = vsel %vm441, %v1034, %v1036
    %v1059 = vsel %vm441, %v1036, %v1038
    %v1060 = vsel %vm441, %v1038, %v1040
    %v1061 = vsel %vm441, %v1040, %v1042
    %v1062 = vsel %vm441, %v1042, %v1044
    %v1063 = vsel %vm441, %v1044, %v1046
    %v1064 = vsel %vm441, %v1046, %v1048
    %v1065 = vsel %vm441, %v1048, %v1050
    %v1066 = vsel %vm441, %v1050, %v1052
    %v1067 = vsel %vm441, %v1052, %v1054
    %v1068 = vsel %vm441, %v1054, %v1056
    %v1071 = vsel %vm441, %v1056, %v1032
    %v1073 = vcombine.low %v1057, %v1058
    %v1074 = vcombine.low %v1059, %v1060
    %v1075 = vcombine.low %v1061, %v1062
    %v1076 = vcombine.low %v1063, %v1064
    %v1078 = vunpack.c.l.s4 1966171168
    %v1079 = vunpack.c.0.s8 %v1078
    %v1080 = vlaneseq
    %v1081 = vshrl.u32 %v1080, 7
    %v1082 = vsub.s32 %v1079, %v1081
    %v1083 = vrot.slane %v1073, %v1082
    %v1085 = vunpack.c.l.s4 1966171168
    %v1086 = vunpack.c.0.s8 %v1085
    %v1087 = vlaneseq
    %v1088 = vshrl.u32 %v1087, 7
    %v1089 = vsub.s32 %v1086, %v1088
    %v1090 = vrot.slane %v1074, %v1089
    %v1092 = vunpack.c.l.s4 1966171168
    %v1093 = vunpack.c.0.s8 %v1092
    %v1094 = vlaneseq
    %v1095 = vshrl.u32 %v1094, 7
    %v1096 = vsub.s32 %v1093, %v1095
    %v1097 = vrot.slane %v1075, %v1096
    %v1099 = vunpack.c.l.s4 1966171168
    %v1100 = vunpack.c.0.s8 %v1099
    %v1101 = vlaneseq
    %v1102 = vshrl.u32 %v1101, 7
    %v1103 = vsub.s32 %v1100, %v1102
    %v1104 = vrot.slane %v1076, %v1103
    %v1105 = vcombine.low %v1083, %v1090
    %v1106 = vcombine.low %v1097, %v1104
    %v1108 = vunpack.c.l.s4 1966171168
    %v1109 = vunpack.c.0.s8 %v1108
    %v1110 = vlaneseq
    %v1111 = vshrl.u32 %v1110, 7
    %v1112 = vsub.s32 %v1109, %v1111
    %v1113 = vrot.slane %v1105, %v1112
    %v1115 = vunpack.c.l.s4 1966171168
    %v1116 = vunpack.c.0.s8 %v1115
    %v1117 = vlaneseq
    %v1118 = vshrl.u32 %v1117, 7
    %v1119 = vsub.s32 %v1116, %v1118
    %v1120 = vrot.slane %v1106, %v1119
    %v1121 = vcombine.low %v1113, %v1120
    %v1122 = vcombine.low %v1065, %v1066
    %v1123 = vcombine.low %v1067, %v1068
    %v1125 = vunpack.c.l.s4 1966171168
    %v1126 = vunpack.c.0.s8 %v1125
    %v1127 = vlaneseq
    %v1128 = vshrl.u32 %v1127, 7
    %v1129 = vsub.s32 %v1126, %v1128
    %v1130 = vrot.slane %v1122, %v1129
    %v1132 = vunpack.c.l.s4 1966171168
    %v1133 = vunpack.c.0.s8 %v1132
    %v1134 = vlaneseq
    %v1135 = vshrl.u32 %v1134, 7
    %v1136 = vsub.s32 %v1133, %v1135
    %v1137 = vrot.slane %v1123, %v1136
    %v1139 = vunpack.c.l.s4 1966171168
    %v1140 = vunpack.c.0.s8 %v1139
    %v1141 = vlaneseq
    %v1142 = vshrl.u32 %v1141, 7
    %v1143 = vsub.s32 %v1140, %v1142
    %v1144 = vrot.slane %v1071, %v1143
    %v1145 = vcombine.low %v1130, %v1137
    %v1147 = vunpack.c.l.s4 1966171168
    %v1148 = vunpack.c.0.s8 %v1147
    %v1149 = vlaneseq
    %v1150 = vshrl.u32 %v1149, 7
    %v1151 = vsub.s32 %v1148, %v1150
    %v1152 = vrot.slane %v1145, %v1151
    %v1154 = vunpack.c.l.s4 1966171168
    %v1155 = vunpack.c.0.s8 %v1154
    %v1156 = vlaneseq
    %v1157 = vshrl.u32 %v1156, 7
    %v1158 = vsub.s32 %v1155, %v1157
    %v1159 = vrot.slane %v1144, %v1158
    %v1160 = vcombine.low %v1152, %v1159
    %v1163 = vsel %vm77, %v1121, %v1029
    %v1164 = vsel %vm78, %v1160, %v1030
    %1165 = vrot.lane.b32.xlu0 %v762, 2
    %v1166 = vpop.permute.xlu0 %1165
    %1168 = vrot.lane.b32.xlu0 %v714, 2
    %v1169 = vpop.permute.xlu0 %1168
    %1170 = vrot.lane.b32.xlu0 %v718, 2
    %v1171 = vpop.permute.xlu0 %1170
    %1172 = vrot.lane.b32.xlu0 %v722, 2
    %v1173 = vpop.permute.xlu0 %1172
    %1174 = vrot.lane.b32.xlu0 %v726, 2
    %v1175 = vpop.permute.xlu0 %1174
    %1176 = vrot.lane.b32.xlu0 %v730, 2
    %v1177 = vpop.permute.xlu0 %1176
    %1178 = vrot.lane.b32.xlu0 %v734, 2
    %v1179 = vpop.permute.xlu0 %1178
    %1180 = vrot.lane.b32.xlu0 %v738, 2
    %v1181 = vpop.permute.xlu0 %1180
    %1182 = vrot.lane.b32.xlu0 %v742, 2
    %v1183 = vpop.permute.xlu0 %1182
    %1184 = vrot.lane.b32.xlu0 %v746, 2
    %v1185 = vpop.permute.xlu0 %1184
    %1186 = vrot.lane.b32.xlu0 %v750, 2
    %v1187 = vpop.permute.xlu0 %1186
    %1188 = vrot.lane.b32.xlu0 %v754, 2
    %v1189 = vpop.permute.xlu0 %1188
    %1190 = vrot.lane.b32.xlu0 %v758, 2
    %v1191 = vpop.permute.xlu0 %1190
    %v1192 = vsel %vm577, %v1169, %v1171
    %v1193 = vsel %vm577, %v1171, %v1173
    %v1194 = vsel %vm577, %v1173, %v1175
    %v1195 = vsel %vm577, %v1175, %v1177
    %v1196 = vsel %vm577, %v1177, %v1179
    %v1197 = vsel %vm577, %v1179, %v1181
    %v1198 = vsel %vm577, %v1181, %v1183
    %v1199 = vsel %vm577, %v1183, %v1185
    %v1200 = vsel %vm577, %v1185, %v1187
    %v1201 = vsel %vm577, %v1187, %v1189
    %v1202 = vsel %vm577, %v1189, %v1191
    %v1203 = vsel %vm577, %v1191, %v1166
    %v1205 = vsel %vm577, %v1166, %v1169
    %v1207 = vcombine.low %v1205, %v1192
    %v1208 = vcombine.low %v1193, %v1194
    %v1209 = vcombine.low %v1195, %v1196
    %v1210 = vcombine.low %v1197, %v1198
    %v1212 = vunpack.c.l.s4 1966171168
    %v1213 = vunpack.c.0.s8 %v1212
    %v1214 = vlaneseq
    %v1215 = vshrl.u32 %v1214, 7
    %v1216 = vsub.s32 %v1213, %v1215
    %v1217 = vrot.slane %v1207, %v1216
    %v1219 = vunpack.c.l.s4 1966171168
    %v1220 = vunpack.c.0.s8 %v1219
    %v1221 = vlaneseq
    %v1222 = vshrl.u32 %v1221, 7
    %v1223 = vsub.s32 %v1220, %v1222
    %v1224 = vrot.slane %v1208, %v1223
    %v1226 = vunpack.c.l.s4 1966171168
    %v1227 = vunpack.c.0.s8 %v1226
    %v1228 = vlaneseq
    %v1229 = vshrl.u32 %v1228, 7
    %v1230 = vsub.s32 %v1227, %v1229
    %v1231 = vrot.slane %v1209, %v1230
    %v1233 = vunpack.c.l.s4 1966171168
    %v1234 = vunpack.c.0.s8 %v1233
    %v1235 = vlaneseq
    %v1236 = vshrl.u32 %v1235, 7
    %v1237 = vsub.s32 %v1234, %v1236
    %v1238 = vrot.slane %v1210, %v1237
    %v1239 = vcombine.low %v1217, %v1224
    %v1240 = vcombine.low %v1231, %v1238
    %v1242 = vunpack.c.l.s4 1966171168
    %v1243 = vunpack.c.0.s8 %v1242
    %v1244 = vlaneseq
    %v1245 = vshrl.u32 %v1244, 7
    %v1246 = vsub.s32 %v1243, %v1245
    %v1247 = vrot.slane %v1239, %v1246
    %v1249 = vunpack.c.l.s4 1966171168
    %v1250 = vunpack.c.0.s8 %v1249
    %v1251 = vlaneseq
    %v1252 = vshrl.u32 %v1251, 7
    %v1253 = vsub.s32 %v1250, %v1252
    %v1254 = vrot.slane %v1240, %v1253
    %v1255 = vcombine.low %v1247, %v1254
    %v1256 = vcombine.low %v1199, %v1200
    %v1257 = vcombine.low %v1201, %v1202
    %v1259 = vunpack.c.l.s4 1966171168
    %v1260 = vunpack.c.0.s8 %v1259
    %v1261 = vlaneseq
    %v1262 = vshrl.u32 %v1261, 7
    %v1263 = vsub.s32 %v1260, %v1262
    %v1264 = vrot.slane %v1256, %v1263
    %v1266 = vunpack.c.l.s4 1966171168
    %v1267 = vunpack.c.0.s8 %v1266
    %v1268 = vlaneseq
    %v1269 = vshrl.u32 %v1268, 7
    %v1270 = vsub.s32 %v1267, %v1269
    %v1271 = vrot.slane %v1257, %v1270
    %v1273 = vunpack.c.l.s4 1966171168
    %v1274 = vunpack.c.0.s8 %v1273
    %v1275 = vlaneseq
    %v1276 = vshrl.u32 %v1275, 7
    %v1277 = vsub.s32 %v1274, %v1276
    %v1278 = vrot.slane %v1203, %v1277
    %v1279 = vcombine.low %v1264, %v1271
    %v1281 = vunpack.c.l.s4 1966171168
    %v1282 = vunpack.c.0.s8 %v1281
    %v1283 = vlaneseq
    %v1284 = vshrl.u32 %v1283, 7
    %v1285 = vsub.s32 %v1282, %v1284
    %v1286 = vrot.slane %v1279, %v1285
    %v1288 = vunpack.c.l.s4 1966171168
    %v1289 = vunpack.c.0.s8 %v1288
    %v1290 = vlaneseq
    %v1291 = vshrl.u32 %v1290, 7
    %v1292 = vsub.s32 %v1289, %v1291
    %v1293 = vrot.slane %v1278, %v1292
    %v1294 = vcombine.low %v1286, %v1293
    %v1297 = vsel %vm81, %v1255, %v1163
    %v1298 = vsel %vm82, %v1294, %v1164
    %v1299 = vmul.f32 %v1297, %v85
    %v1300 = vmul.f32 %v1298, %v86
    %s1301 = scalar_lea.vmem [#allocation10], %s83
    %1302 = vst [vmem:[%s1301] sm:$0xff] %v1299
    %v1303 = vlaneseq
    %vm1304 = vcmp.ge.s32.totalorder %v1303, 0
    %vm1305 = vcmp.lt.s32.totalorder %v1303, 640
    %vm1306 = vmand %vm1304, %vm1305
    %1307 = vst.msk [vmem:[%s1301 + $0x8] sm:$0x1f] %vm1306, %v1300
    // Predicated region
    $region34: #{tpu_custom_call.1} parent=1 // pred_check
      _
    $region35: #{tpu_custom_call.1} parent=1 // pred_check_branch
      %1309 = sbr.rel (0) target = $region37
    $region36: #{tpu_custom_call.1} parent=1 // pred_region
      %s1311 = ssub.s32 208, 208
      %1312 = vsyncadd [#allocation4], %s1311
      %s1314 = sshll.u32 [#allocation10], 4
      %s1315 = int_to_ptr.vmem [resolvable:$true] %s1314
      %1317 = dma.vmem_to_hbm [thread:$0]  %s1315, 208, %s4, [#allocation4]
    $region37: #{tpu_custom_call.1} parent=1 // pred_fallthru
      _
    // Predicated region
    $region38: #{tpu_custom_call.1} parent=1 // pred_check
      _
    $region39: #{tpu_custom_call.1} parent=1 // pred_check_branch
      %1319 = sbr.rel (0) target = $region41
    $region40: #{tpu_custom_call.1} parent=1 // pred_region
      %1320 = dma.done [#allocation4], 208
    $region41: #{tpu_custom_call.1} parent=1 // pred_fallthru
      _
    %1321 = vsyncpa [#allocation3], 1
    %1322 = vsyncpa [#allocation6], 1
    %1323 = vsyncpa [#allocation9], 1
    %1324 = vsyncpa [#allocation4], 1

</llo_original>
